<compile_context>
chip_gen: v7x
topology: tpu7x:2x2x1
jax: 0.10.0
libtpu: 0.0.40
codegen_flags: <defaults>
</compile_context>

<pallas_src>
import functools

import jax
import jax.numpy as jnp
import numpy as np
from jax.experimental import pallas as pl
from jax.experimental.pallas import tpu as pltpu

# Plain Python float (NOT a jnp scalar) so kernels do not capture a traced constant.
_NEG_LARGE = -1e30


def _round_up(a, b):
    return ((a + b - 1) // b) * b


# --------------------------------------------------------------------------
# Kernel 1: per-layer feature transform + attention logits (tiled over nodes)
# --------------------------------------------------------------------------
def _gat_transform_kernel(x_ref, w_ref, asrc_ref, adst_ref,
                          xp_ref, a_srcT_ref, a_dst_ref):
    """xp = x @ W (f32 accumulation) + per-head logits via 2 block-diag matmuls."""
    xp = jnp.dot(x_ref[...], w_ref[...], preferred_element_type=jnp.float32)
    xp_ref[...] = xp.astype(xp_ref.dtype)            # stored in agg dtype (bf16 fast path)
    # a_dst[n, h] = sum_c xp[n, h*C + c] * att_dst[h, c]
    a_dst_ref[...] = jax.lax.dot_general(
        xp, adst_ref[...], (((1,), (1,)), ((), ())),
        preferred_element_type=jnp.float32)           # [tn, H]
    # a_srcT[h, n] = sum_c att_src[h, c] * xp[n, h*C + c]
    a_srcT_ref[...] = jax.lax.dot_general(
        asrc_ref[...], xp, (((1,), (1,)), ((), ())),
        preferred_element_type=jnp.float32)           # [H, tn]


# --------------------------------------------------------------------------
# Kernel 2: masked softmax attention + aggregation
#   grid = (i tiles over targets [parallel], j tiles over sources [arbitrary])
#   Softmax shift m[i,h] is precomputed (exact unmasked row max), so the inner
#   loop is pure accumulation: acc += p @ xp, l += sum(p).
# --------------------------------------------------------------------------
def _gat_attn_kernel(a_dst_ref, m_ref, a_srcT_ref, xp_ref, adj_ref, b_ref,
                     out_ref, l_sc, acc_sc, *, heads, out_ch, apply_elu,
                     agg_dtype, approx_recip):
    j = pl.program_id(1)

    @pl.when(j == 0)
    def _init():
        l_sc[...] = jnp.zeros_like(l_sc)
        acc_sc[...] = jnp.zeros_like(acc_sc)

    a_dst = a_dst_ref[...]                  # [ti, H]  f32
    m_row = m_ref[...]                      # [ti, H]  f32  (row-max bound)
    a_srcT = a_srcT_ref[...]                # [H, tj]  f32
    # int8 adjacency widened and turned into an additive mask ONCE per tile.
    mask_add = jnp.where(adj_ref[...].astype(jnp.float32) > 0.0, 0.0, _NEG_LARGE)
    xp_j = xp_ref[...]                      # [tj, H*C] already in agg_dtype

    acc_parts = []
    l_parts = []
    for h in range(heads):
        hs, he = h * out_ch, (h + 1) * out_ch
        z = a_dst[:, h:h + 1] + a_srcT[h:h + 1, :]          # [ti, tj]
        e = jnp.maximum(z, 0.2 * z)                         # LeakyReLU(0.2)
        # e - m_row <= 0 for edges; off-edge gets ~-1e30 -> exp == exactly 0.
        p = jnp.exp(e - m_row[:, h:h + 1] + mask_add)       # [ti, tj]  f32
        acc_parts.append(jnp.dot(p.astype(agg_dtype), xp_j[:, hs:he],
                                 preferred_element_type=jnp.float32))  # [ti, C]
        l_parts.append(jnp.sum(p, axis=-1, keepdims=True))             # [ti, 1]

    # ONE full-width accumulate per (i, j) step (no per-head 8-lane stores).
    acc_sc[...] += jnp.concatenate(acc_parts, axis=1)
    l_sc[...] += jnp.concatenate(l_parts, axis=1)

    @pl.when(j == pl.num_programs(1) - 1)
    def _finalize():
        # Clamp keeps zero-padded target rows (no edges -> l == 0) finite so they
        # can never propagate NaNs into the next layer; real rows have self-loops.
        denom = jnp.maximum(l_sc[...], 1e-20)
        inv_l = pl.reciprocal(denom, approx=approx_recip)   # [ti, H]
        parts = [acc_sc[:, h * out_ch:(h + 1) * out_ch] * inv_l[:, h:h + 1]
                 for h in range(heads)]
        out = jnp.concatenate(parts, axis=1) + b_ref[...]   # bias hoisted here
        if apply_elu:
            out = jnp.where(out > 0, out, jnp.exp(jnp.minimum(out, 0.0)) - 1.0)
        out_ref[...] = out.astype(out_ref.dtype)            # ONE full-width store


# --------------------------------------------------------------------------
# Python wrappers
# --------------------------------------------------------------------------
def _block_diag_heads(att, heads, out_ch):
    """[H, C] -> [H, H*C] with att[h] placed in lane block h (zeros elsewhere)."""
    eye = jnp.eye(heads, dtype=att.dtype)
    return (eye[:, :, None] * att[None, :, :]).reshape(heads, heads * out_ch)


def gat_conv_pallas(x_pad, w, att_src, att_dst, adj_pad, bias, *, heads, out_ch,
                    apply_elu=False, block_i=256, block_j=1024,
                    agg_dtype=jnp.bfloat16):
    """One GATConv layer on a node-padded dense int8 adjacency.

    x_pad   : [N_pad, F_in]  (N_pad multiple of block_i and block_j)
    adj_pad : [N_pad, N_pad] int8, adj[i, j] = 1 iff edge j -> i (+ self loops)
    Returns [N_pad, heads*out_ch] (channel padding stripped).
    """
    n_pad, f_in = x_pad.shape
    assert n_pad % block_i == 0 and n_pad % block_j == 0

    # Pad conv2's tiny channel count to a lane-friendly width (3 -> 128);
    # zero-padded weight / att / bias columns contribute exactly 0.
    out_ch_p = out_ch
    if heads == 1 and out_ch < 128:
        out_ch_p = 128
        pad = out_ch_p - out_ch
        w = jnp.pad(w, ((0, 0), (0, pad)))
        att_src = jnp.pad(att_src, ((0, 0), (0, pad)))
        att_dst = jnp.pad(att_dst, ((0, 0), (0, pad)))
        bias = jnp.pad(bias, ((0, 0), (0, pad)))
    hc = heads * out_ch_p

    asrc_bd = _block_diag_heads(att_src, heads, out_ch_p)    # [H, H*C]
    adst_bd = _block_diag_heads(att_dst, heads, out_ch_p)    # [H, H*C]

    # bf16 MXU operands on the fast path (f32 accumulation); exact path stays f32.
    x_in = x_pad.astype(agg_dtype)
    w_in = w.astype(agg_dtype)

    # ---- pass 1: feature transform + attention logits, tiled over nodes ----
    xp, a_srcT, a_dst = pl.pallas_call(
        _gat_transform_kernel,
        grid_spec=pltpu.PrefetchScalarGridSpec(
            num_scalar_prefetch=0,
            grid=(n_pad // block_i,),
            in_specs=[
                pl.BlockSpec((block_i, f_in), lambda n: (n, 0)),  # x tile
                pl.BlockSpec((f_in, hc), lambda n: (0, 0)),       # W
                pl.BlockSpec((heads, hc), lambda n: (0, 0)),      # A_src (blkdiag)
                pl.BlockSpec((heads, hc), lambda n: (0, 0)),      # A_dst (blkdiag)
            ],
            out_specs=[
                pl.BlockSpec((block_i, hc), lambda n: (n, 0)),    # xp (agg dtype)
                pl.BlockSpec((heads, block_i), lambda n: (0, n)), # a_srcT [H, N]
                pl.BlockSpec((block_i, heads), lambda n: (n, 0)), # a_dst  [N, H]
            ],
        ),
        out_shape=[
            jax.ShapeDtypeStruct((n_pad, hc), agg_dtype),
            jax.ShapeDtypeStruct((heads, n_pad), jnp.float32),
            jax.ShapeDtypeStruct((n_pad, heads), jnp.float32),
        ],
        compiler_params=pltpu.CompilerParams(
            dimension_semantics=("parallel",)),
    )(x_in, w_in, asrc_bd, adst_bd)

    # Precomputed per-row/per-head softmax shift (tiny XLA ops between passes):
    # LeakyReLU is monotone, so max_j LeakyReLU(a_dst[i]+a_src[j])
    #   = LeakyReLU(a_dst[i] + max_j a_src[j])  (exact unmasked row max >= masked max).
    a_src_max = jnp.max(a_srcT, axis=1)                       # [H]
    z = a_dst + a_src_max[None, :]                            # [N_pad, H]
    m_row = jnp.maximum(z, 0.2 * z)                           # [N_pad, H]

    # ---- pass 2: masked softmax attention + aggregation over source tiles ----
    kernel = functools.partial(
        _gat_attn_kernel, heads=heads, out_ch=out_ch_p, apply_elu=apply_elu,
        agg_dtype=agg_dtype, approx_recip=(agg_dtype == jnp.bfloat16))
    out = pl.pallas_call(
        kernel,
        grid_spec=pltpu.PrefetchScalarGridSpec(
            num_scalar_prefetch=0,
            grid=(n_pad // block_i, n_pad // block_j),
            in_specs=[
                pl.BlockSpec((block_i, heads), lambda i, j: (i, 0)),    # a_dst
                pl.BlockSpec((block_i, heads), lambda i, j: (i, 0)),    # m_row
                pl.BlockSpec((heads, block_j), lambda i, j: (0, j)),    # a_srcT
                pl.BlockSpec((block_j, hc), lambda i, j: (j, 0)),       # xp (sources)
                pl.BlockSpec((block_i, block_j), lambda i, j: (i, j)),  # adj int8
                pl.BlockSpec((1, hc), lambda i, j: (0, 0)),             # bias
            ],
            out_specs=pl.BlockSpec((block_i, hc), lambda i, j: (i, 0)),
            scratch_shapes=[
                pltpu.VMEM((block_i, heads), jnp.float32),  # denominator l (compact)
                pltpu.VMEM((block_i, hc), jnp.float32),     # numerator acc
            ],
        ),
        out_shape=jax.ShapeDtypeStruct((n_pad, hc), jnp.float32),
        compiler_params=pltpu.CompilerParams(
            dimension_semantics=("parallel", "arbitrary"),
            vmem_limit_bytes=48 * 1024 * 1024),   # headroom for big tiles, < v7x 64 MiB
    )(a_dst, m_row, a_srcT, xp, adj_pad, bias)

    if out_ch_p != out_ch:
        out = out[:, :heads * out_ch]
    return out


def gat_forward(x, adj_int8, params, *, heads, hidden, num_classes,
                block_i=256, block_j=1024, agg_dtype=jnp.bfloat16):
    """Full GAT forward (eval mode). adj_int8[i, j] = 1 iff edge j -> i (+loops)."""
    n = x.shape[0]
    # Clamp tile sizes for tiny graphs; both stay multiples of 128.
    cap = _round_up(n, 128)
    bi = min(block_i, cap)
    bj = min(block_j, cap)
    n_pad = _round_up(n, int(np.lcm(bi, bj)))
    x_pad = jnp.pad(x, ((0, n_pad - n), (0, 0)))
    adj_pad = jnp.pad(adj_int8, ((0, n_pad - n), (0, n_pad - n)))

    # F.dropout(p=0.6): identity in eval mode.
    h = gat_conv_pallas(x_pad, params["w1"], params["att_src1"],
                        params["att_dst1"], adj_pad, params["b1"],
                        heads=heads, out_ch=hidden, apply_elu=True,
                        block_i=bi, block_j=bj, agg_dtype=agg_dtype)
    # F.dropout(p=0.6): identity in eval mode.
    out = gat_conv_pallas(h, params["w2"], params["att_src2"],
                          params["att_dst2"], adj_pad, params["b2"],
                          heads=1, out_ch=num_classes, apply_elu=False,
                          block_i=bi, block_j=bj, agg_dtype=agg_dtype)
    return out[:n]


# ---------------- pure-JAX reference (for a sanity check) ----------------
def _gat_conv_ref(x, w, att_src, att_dst, adj, bias, heads, out_ch, apply_elu):
    n = x.shape[0]
    xp = (x @ w).reshape(n, heads, out_ch)
    a_s = jnp.sum(xp * att_src[None], axis=-1)                    # [N, H]
    a_d = jnp.sum(xp * att_dst[None], axis=-1)                    # [N, H]
    e = a_d[:, None, :] + a_s[None, :, :]                         # [N, N, H]
    e = jnp.where(e > 0, e, 0.2 * e)
    e = jnp.where(adj[:, :, None] > 0, e, -1e30)
    e = e - jnp.max(e, axis=1, keepdims=True)
    p = jnp.exp(e) * adj[:, :, None]
    attn = p / jnp.sum(p, axis=1, keepdims=True)
    out = jnp.einsum('ijh,jhc->ihc', attn, xp).reshape(n, heads * out_ch) + bias
    if apply_elu:
        out = jnp.where(out > 0, out, jnp.exp(jnp.minimum(out, 0.0)) - 1.0)
    return out


def _gat_forward_ref(x, adj, params, *, heads, hidden, num_classes):
    h = _gat_conv_ref(x, params["w1"], params["att_src1"], params["att_dst1"],
                      adj, params["b1"], heads, hidden, True)
    return _gat_conv_ref(h, params["w2"], params["att_src2"], params["att_dst2"],
                         adj, params["b2"], 1, num_classes, False)


if __name__ == "__main__":
    # Small synthetic stand-in for PubMed: N nodes, F_IN input features,
    # hidden_channels=8, heads=8, 3 classes, E random directed edges.
    N, F_IN, HIDDEN, HEADS, NUM_CLASSES, E = 64, 32, 8, 8, 3, 256

    key = jax.random.PRNGKey(0)
    ks = jax.random.split(key, 8)

    x = jax.random.normal(ks[0], (N, F_IN), jnp.float32)
    src = jax.random.randint(ks[1], (E,), 0, N)
    dst = jax.random.randint(ks[2], (E,), 0, N)

    # Dense int8 adjacency: adj[i, j] = 1 iff edge j -> i; add self-loops.
    adj32 = jnp.zeros((N, N), jnp.int32).at[dst, src].set(1)
    adj32 = adj32.at[jnp.arange(N), jnp.arange(N)].set(1)
    adj = adj32.astype(jnp.int8)

    # Deterministic parameter init (glorot-ish scale, zero biases like PyG).
    def _init(k, shape):
        fan = shape[0] + shape[-1]
        return jax.random.normal(k, shape, jnp.float32) * jnp.sqrt(2.0 / fan)

    params = {
        "w1": _init(ks[3], (F_IN, HEADS * HIDDEN)),
        "att_src1": _init(ks[4], (HEADS, HIDDEN)),
        "att_dst1": _init(ks[5], (HEADS, HIDDEN)),
        "b1": jnp.zeros((1, HEADS * HIDDEN), jnp.float32),
        "w2": _init(ks[6], (HEADS * HIDDEN, NUM_CLASSES)),
        "att_src2": _init(ks[7], (1, NUM_CLASSES)),
        "att_dst2": _init(jax.random.fold_in(key, 99), (1, NUM_CLASSES)),
        "b2": jnp.zeros((1, NUM_CLASSES), jnp.float32),
    }

    run = functools.partial(gat_forward, heads=HEADS, hidden=HIDDEN,
                            num_classes=NUM_CLASSES)

    out_bf16 = jax.block_until_ready(run(x, adj, params))             # default bf16 MXU path
    out_f32 = jax.block_until_ready(run(x, adj, params,
                                        agg_dtype=jnp.float32))       # exact path

    ref = _gat_forward_ref(x, adj.astype(jnp.float32), params,
                           heads=HEADS, hidden=HIDDEN, num_classes=NUM_CLASSES)

    # Exact (f32) path: tight check. bf16 path: loose check (two layers of bf16
    # matmuls + bf16 xp storage accumulate a few percent of error).
    np.testing.assert_allclose(np.asarray(out_f32), np.asarray(ref),
                               rtol=1e-2, atol=1e-2)
    np.testing.assert_allclose(np.asarray(out_bf16), np.asarray(ref),
                               rtol=1e-1, atol=1e-1)
    assert out_bf16.shape == (N, NUM_CLASSES)
    print("KERNEL_OK")
</pallas_src>

<mosaic_0001>
module attributes {stable_mosaic.version = 11 : i64} {
  func.func @_gat_transform_kernel(%arg0: i32, %arg1: memref<128x32xbf16, #tpu.memory_space<vmem>>, %arg2: memref<32x64xbf16, #tpu.memory_space<vmem>>, %arg3: memref<8x64xf32, #tpu.memory_space<vmem>>, %arg4: memref<8x64xf32, #tpu.memory_space<vmem>>, %arg5: memref<128x64xbf16, #tpu.memory_space<vmem>>, %arg6: memref<8x128xf32, #tpu.memory_space<vmem>>, %arg7: memref<128x8xf32, #tpu.memory_space<vmem>>) attributes {dimension_semantics = [#tpu.dimension_semantics<parallel>], iteration_bounds = array<i64: 1>, scalar_prefetch = 0 : i64, scratch_operands = 0 : i64, tpu.core_type = #tpu.core_type<tc>, window_params = [{transform_indices = @transform_0, window_bounds = array<i64: 128, 32>}, {pipeline_mode = #tpu.pipeline_mode<synchronous>, transform_indices = @transform_1, window_bounds = array<i64: 32, 64>}, {pipeline_mode = #tpu.pipeline_mode<synchronous>, transform_indices = @transform_2, window_bounds = array<i64: 8, 64>}, {pipeline_mode = #tpu.pipeline_mode<synchronous>, transform_indices = @transform_3, window_bounds = array<i64: 8, 64>}, {transform_indices = @transform_4, window_bounds = array<i64: 128, 64>}, {transform_indices = @transform_5, window_bounds = array<i64: 8, 128>}, {transform_indices = @transform_6, window_bounds = array<i64: 128, 8>}]} {
    %c0 = arith.constant 0 : index
    %c0_0 = arith.constant 0 : index
    %0 = vector.load %arg1[%c0, %c0_0] : memref<128x32xbf16, #tpu.memory_space<vmem>>, vector<128x32xbf16>
    %c0_1 = arith.constant 0 : index
    %c0_2 = arith.constant 0 : index
    %1 = vector.load %arg2[%c0_1, %c0_2] : memref<32x64xbf16, #tpu.memory_space<vmem>>, vector<32x64xbf16>
    %cst = arith.constant dense<0.000000e+00> : vector<128x64xf32>
    %2 = tpu.matmul %0, %1, %cst {dimension_numbers = #tpu.dot_dimension_numbers<[1], [0], [0], [1], [0, 0, 1, 1], [], []>} : vector<128x32xbf16>, vector<32x64xbf16>, vector<128x64xf32> -> vector<128x64xf32>
    %3 = arith.truncf %2 : vector<128x64xf32> to vector<128x64xbf16>
    %c0_3 = arith.constant 0 : index
    %c0_4 = arith.constant 0 : index
    %4 = vector.load %arg5[%c0_3, %c0_4] : memref<128x64xbf16, #tpu.memory_space<vmem>>, vector<128x64xbf16>
    tpu.vector_store %arg5[%c0_3, %c0_4], %3 {strides = array<i32>} : memref<128x64xbf16, #tpu.memory_space<vmem>>, vector<128x64xbf16>,
    %c0_5 = arith.constant 0 : index
    %c0_6 = arith.constant 0 : index
    %5 = vector.load %arg4[%c0_5, %c0_6] : memref<8x64xf32, #tpu.memory_space<vmem>>, vector<8x64xf32>
    %cst_7 = arith.constant dense<0.000000e+00> : vector<128x8xf32>
    %6 = tpu.matmul %2, %5, %cst_7 {dimension_numbers = #tpu.dot_dimension_numbers<[1], [1], [0], [0], [0, 0, 1, 0], [], []>} : vector<128x64xf32>, vector<8x64xf32>, vector<128x8xf32> -> vector<128x8xf32>
    %c0_8 = arith.constant 0 : index
    %c0_9 = arith.constant 0 : index
    %7 = vector.load %arg7[%c0_8, %c0_9] : memref<128x8xf32, #tpu.memory_space<vmem>>, vector<128x8xf32>
    tpu.vector_store %arg7[%c0_8, %c0_9], %6 {strides = array<i32>} : memref<128x8xf32, #tpu.memory_space<vmem>>, vector<128x8xf32>,
    %c0_10 = arith.constant 0 : index
    %c0_11 = arith.constant 0 : index
    %8 = vector.load %arg3[%c0_10, %c0_11] : memref<8x64xf32, #tpu.memory_space<vmem>>, vector<8x64xf32>
    %cst_12 = arith.constant dense<0.000000e+00> : vector<8x128xf32>
    %9 = tpu.matmul %8, %2, %cst_12 {dimension_numbers = #tpu.dot_dimension_numbers<[1], [1], [0], [0], [0, 0, 1, 0], [], []>} : vector<8x64xf32>, vector<128x64xf32>, vector<8x128xf32> -> vector<8x128xf32>
    %c0_13 = arith.constant 0 : index
    %c0_14 = arith.constant 0 : index
    %10 = vector.load %arg6[%c0_13, %c0_14] : memref<8x128xf32, #tpu.memory_space<vmem>>, vector<8x128xf32>
    tpu.vector_store %arg6[%c0_13, %c0_14], %9 {strides = array<i32>} : memref<8x128xf32, #tpu.memory_space<vmem>>, vector<8x128xf32>,
    return
  }
  func.func @transform_0(%arg0: i32) -> (i32, i32) {
    %c0_i32 = arith.constant 0 : i32
    %c0_i32_0 = arith.constant 0 : i32
    return %arg0, %c0_i32 : i32, i32
  }
  func.func @transform_1(%arg0: i32) -> (i32, i32) {
    %c0_i32 = arith.constant 0 : i32
    %c0_i32_0 = arith.constant 0 : i32
    %c0_i32_1 = arith.constant 0 : i32
    return %c0_i32, %c0_i32_0 : i32, i32
  }
  func.func @transform_2(%arg0: i32) -> (i32, i32) {
    %c0_i32 = arith.constant 0 : i32
    %c0_i32_0 = arith.constant 0 : i32
    %c0_i32_1 = arith.constant 0 : i32
    return %c0_i32, %c0_i32_0 : i32, i32
  }
  func.func @transform_3(%arg0: i32) -> (i32, i32) {
    %c0_i32 = arith.constant 0 : i32
    %c0_i32_0 = arith.constant 0 : i32
    %c0_i32_1 = arith.constant 0 : i32
    return %c0_i32, %c0_i32_0 : i32, i32
  }
  func.func @transform_4(%arg0: i32) -> (i32, i32) {
    %c0_i32 = arith.constant 0 : i32
    %c0_i32_0 = arith.constant 0 : i32
    return %arg0, %c0_i32 : i32, i32
  }
  func.func @transform_5(%arg0: i32) -> (i32, i32) {
    %c0_i32 = arith.constant 0 : i32
    %c0_i32_0 = arith.constant 0 : i32
    return %c0_i32, %arg0 : i32, i32
  }
  func.func @transform_6(%arg0: i32) -> (i32, i32) {
    %c0_i32 = arith.constant 0 : i32
    %c0_i32_0 = arith.constant 0 : i32
    return %arg0, %c0_i32 : i32, i32
  }
}

</mosaic_0001>

<llo_original>
// kernel: tpu_custom_call.1
$region0: #{tpu_custom_call.1}
  #allocation0 [shape = 'u32[]', space=smem, size = 0x4, offset = 0x4, fixed_abs, tag = 'smem constant byte address 0x4 - core index']
  #allocation1 [shape = 'u32[144,128]{1,0:T(1,128)}', space=vmem, size = 0x12000, scoped, tag = 'internal scratch']
  %s0 = inlined_call_operand.vmem [shape: bf16[128,32], index: 0, kind: input, shape index: {}]
  %s1 = inlined_call_operand.vmem [shape: bf16[32,64], index: 1, kind: input, shape index: {}]
  %s2 = inlined_call_operand.vmem [shape: f32[8,64], index: 2, kind: input, shape index: {}]
  %s3 = inlined_call_operand.vmem [shape: f32[8,64], index: 3, kind: input, shape index: {}]
  %s4 = inlined_call_operand.vmem [shape: bf16[128,64], index: 4, kind: output, shape index: {0}]
  %s5 = inlined_call_operand.hbm [shape: f32[8,128], index: 5, kind: output, shape index: {1}]
  %s6 = inlined_call_operand.vmem [shape: f32[128,8], index: 6, kind: output, shape index: {2}]
  %7 = xla_tuple %s4, %s5, %s6
  %s8 = sld [smem:[#allocation0]]
  $region42: #{tpu_custom_call.1} parent=0
    _
  %s10 = ssub.s32 1, %s8
  %s11 = scalar_select 0, %s10, %s8
  $region1: #{tpu_custom_call.1} parent=0
    #allocation2 [shape = 'u8[4096]{0}', space=vmem, size = 0x1000, scoped, tag = 'output window, operand 1, single buffered']
    #allocation3 [shape = 's32[1]{0}', space=sflag, size = 0x4, scoped, tag = 'scoped memory for tpu_custom_call.1']
    %12 = vsyncpa [#allocation3], 0
    // Predicated region
    $region2: #{tpu_custom_call.1} parent=1 // pred_check
      _
    $region3: #{tpu_custom_call.1} parent=1 // pred_check_branch
      %14 = sbr.rel (0) target = $region5
    $region4: #{tpu_custom_call.1} parent=1 // pred_region
      _
    $region5: #{tpu_custom_call.1} parent=1 // pred_fallthru
      _
    // Predicated region
    $region6: #{tpu_custom_call.1} parent=1 // pred_check
      _
    $region7: #{tpu_custom_call.1} parent=1 // pred_check_branch
      %16 = sbr.rel (0) target = $region9
    $region8: #{tpu_custom_call.1} parent=1 // pred_region
      _
    $region9: #{tpu_custom_call.1} parent=1 // pred_fallthru
      _
    // Predicated region
    $region10: #{tpu_custom_call.1} parent=1 // pred_check
      _
    $region11: #{tpu_custom_call.1} parent=1 // pred_check_branch
      %18 = sbr.rel (0) target = $region13
    $region12: #{tpu_custom_call.1} parent=1 // pred_region
      _
    $region13: #{tpu_custom_call.1} parent=1 // pred_fallthru
      _
    // Predicated region
    $region14: #{tpu_custom_call.1} parent=1 // pred_check
      _
    $region15: #{tpu_custom_call.1} parent=1 // pred_check_branch
      %20 = sbr.rel (0) target = $region17
    $region16: #{tpu_custom_call.1} parent=1 // pred_region
      _
    $region17: #{tpu_custom_call.1} parent=1 // pred_fallthru
      _
    %v22 = vld [vmem:[%s0] sm:$0xf]
    %v23 = vld [vmem:[%s0 + $0x4] sm:$0xf]
    %v24 = vld [vmem:[%s0 + $0x8] sm:$0xf]
    %v25 = vld [vmem:[%s0 + $0xc] sm:$0xf]
    %v26 = vld [vmem:[%s0 + $0x10] sm:$0xf]
    %v27 = vld [vmem:[%s0 + $0x14] sm:$0xf]
    %v28 = vld [vmem:[%s0 + $0x18] sm:$0xf]
    %v29 = vld [vmem:[%s0 + $0x1c] sm:$0xf]
    %v30 = vld [vmem:[%s0 + $0x20] sm:$0xf]
    %v31 = vld [vmem:[%s0 + $0x24] sm:$0xf]
    %v32 = vld [vmem:[%s0 + $0x28] sm:$0xf]
    %v33 = vld [vmem:[%s0 + $0x2c] sm:$0xf]
    %v34 = vld [vmem:[%s0 + $0x30] sm:$0xf]
    %v35 = vld [vmem:[%s0 + $0x34] sm:$0xf]
    %v36 = vld [vmem:[%s0 + $0x38] sm:$0xf]
    %v37 = vld [vmem:[%s0 + $0x3c] sm:$0xf]
    %v38 = vld [vmem:[%s1] sm:$0xf]
    %v39 = vld [vmem:[%s1 + $0x4] sm:$0xf]
    %v40 = vld [vmem:[%s1 + $0x8] sm:$0xf]
    %v41 = vld [vmem:[%s1 + $0xc] sm:$0xf]
    %v58 = vunpack.c.l.b16 %v22
    %v59 = vunpack.c.l.b16 %v23
    %v60 = vunpack.c.l.b16 %v24
    %v61 = vunpack.c.l.b16 %v25
    %v62 = vunpack.c.l.b16 %v26
    %v63 = vunpack.c.l.b16 %v27
    %v64 = vunpack.c.l.b16 %v28
    %v65 = vunpack.c.l.b16 %v29
    %v66 = vunpack.c.l.b16 %v30
    %v67 = vunpack.c.l.b16 %v31
    %v68 = vunpack.c.l.b16 %v32
    %v69 = vunpack.c.l.b16 %v33
    %v70 = vunpack.c.l.b16 %v34
    %v71 = vunpack.c.l.b16 %v35
    %v72 = vunpack.c.l.b16 %v36
    %v73 = vunpack.c.l.b16 %v37
    %v74 = vpack.c.b16 %v59, %v58
    %v75 = vpack.c.b16 %v61, %v60
    %v76 = vpack.c.b16 %v63, %v62
    %v77 = vpack.c.b16 %v65, %v64
    %v78 = vpack.c.b16 %v67, %v66
    %v79 = vpack.c.b16 %v69, %v68
    %v80 = vpack.c.b16 %v71, %v70
    %v81 = vpack.c.b16 %v73, %v72
    %v86 = vunpack.c.l.b16 %v38
    %v87 = vunpack.c.l.b16 %v39
    %v88 = vunpack.c.l.b16 %v40
    %v89 = vunpack.c.l.b16 %v41
    %v90 = vpack.c.b16 %v87, %v86
    %v91 = vpack.c.b16 %v89, %v88
    %vm94 = vcmask 261120
    %v96 = vsel %vm94, %v74, 0
    %v99 = vsel %vm94, %v75, 0
    %v102 = vsel %vm94, %v76, 0
    %v105 = vsel %vm94, %v77, 0
    %v108 = vsel %vm94, %v78, 0
    %v111 = vsel %vm94, %v79, 0
    %v114 = vsel %vm94, %v80, 0
    %v117 = vsel %vm94, %v81, 0
    %119 = vmatprep.subr.bf16.mxu0 0
    %120 = vmatpush1.bf16.msra.mxu0 %v90
    %121 = vmatprep.subr.bf16.mxu0 0
    %122 = vmatpush1.bf16.msra.mxu0 %v91
    %123 = vmatprep.subr.bf16.mxu0 0
    %124 = vmatpush1.bf16.msra.mxu0 0
    %125 = vmatprep.subr.bf16.mxu0 0
    %126 = vmatpush1.bf16.msra.mxu0 0
    %127 = vmatprep.subr.bf16.mxu0 0
    %128 = vmatpush1.bf16.msra.mxu0 0
    %129 = vmatprep.subr.bf16.mxu0 0
    %130 = vmatpush1.bf16.msra.mxu0 0
    %131 = vmatprep.subr.bf16.mxu0 0
    %132 = vmatpush1.bf16.msra.mxu0 0
    %133 = vmatprep.subr.bf16.mxu0 0
    %134 = vmatpush1.bf16.msra.mxu0 0
    %135 = vmatprep.subr.bf16.mxu0 0
    %136 = vmatpush1.bf16.msra.mxu0 0
    %137 = vmatprep.subr.bf16.mxu0 0
    %138 = vmatpush1.bf16.msra.mxu0 0
    %139 = vmatprep.subr.bf16.mxu0 0
    %140 = vmatpush1.bf16.msra.mxu0 0
    %141 = vmatprep.subr.bf16.mxu0 0
    %142 = vmatpush1.bf16.msra.mxu0 0
    %143 = vmatprep.subr.bf16.mxu0 0
    %144 = vmatpush1.bf16.msra.mxu0 0
    %145 = vmatprep.subr.bf16.mxu0 0
    %146 = vmatpush1.bf16.msra.mxu0 0
    %147 = vmatprep.subr.bf16.mxu0 0
    %148 = vmatpush1.bf16.msra.mxu0 0
    %149 = vmatprep.subr.bf16.mxu0 0
    %150 = vmatpush1.bf16.msra.mxu0 0
    %151 = vmatprep.mubr.bf16.mxu0 0
    %152 = vmatmul.mubr.bf16.gmra.mrb[0].mxu0 %v96
    %v153 = vpop.f32.mrb[0].mxu0
    %v154 = vadd.f32 0.0, %v153
    %v155 = vpop.f32.mrb[0].mxu0
    %v156 = vpop.f32.mrb[0].mxu0
    %v157 = vadd.f32 0.0, %v156
    %v158 = vpop.f32.mrb[0].mxu0
    %159 = vmatprep.mubr.bf16.mxu0 0
    %160 = vmatmul.mubr.bf16.gmra.mrb[0].mxu0 %v99
    %v161 = vpop.f32.mrb[0].mxu0
    %v162 = vadd.f32 0.0, %v161
    %v163 = vpop.f32.mrb[0].mxu0
    %v164 = vpop.f32.mrb[0].mxu0
    %v165 = vadd.f32 0.0, %v164
    %v166 = vpop.f32.mrb[0].mxu0
    %167 = vmatprep.mubr.bf16.mxu0 0
    %168 = vmatmul.mubr.bf16.gmra.mrb[0].mxu0 %v102
    %v169 = vpop.f32.mrb[0].mxu0
    %v170 = vadd.f32 0.0, %v169
    %v171 = vpop.f32.mrb[0].mxu0
    %v172 = vpop.f32.mrb[0].mxu0
    %v173 = vadd.f32 0.0, %v172
    %v174 = vpop.f32.mrb[0].mxu0
    %175 = vmatprep.mubr.bf16.mxu0 0
    %176 = vmatmul.mubr.bf16.gmra.mrb[0].mxu0 %v105
    %v177 = vpop.f32.mrb[0].mxu0
    %v178 = vadd.f32 0.0, %v177
    %v179 = vpop.f32.mrb[0].mxu0
    %v180 = vpop.f32.mrb[0].mxu0
    %v181 = vadd.f32 0.0, %v180
    %v182 = vpop.f32.mrb[0].mxu0
    %183 = vmatprep.mubr.bf16.mxu0 0
    %184 = vmatmul.mubr.bf16.gmra.mrb[0].mxu0 %v108
    %v185 = vpop.f32.mrb[0].mxu0
    %v186 = vadd.f32 0.0, %v185
    %v187 = vpop.f32.mrb[0].mxu0
    %v188 = vpop.f32.mrb[0].mxu0
    %v189 = vadd.f32 0.0, %v188
    %v190 = vpop.f32.mrb[0].mxu0
    %191 = vmatprep.mubr.bf16.mxu0 0
    %192 = vmatmul.mubr.bf16.gmra.mrb[0].mxu0 %v111
    %v193 = vpop.f32.mrb[0].mxu0
    %v194 = vadd.f32 0.0, %v193
    %v195 = vpop.f32.mrb[0].mxu0
    %v196 = vpop.f32.mrb[0].mxu0
    %v197 = vadd.f32 0.0, %v196
    %v198 = vpop.f32.mrb[0].mxu0
    %199 = vmatprep.mubr.bf16.mxu0 0
    %200 = vmatmul.mubr.bf16.gmra.mrb[0].mxu0 %v114
    %v201 = vpop.f32.mrb[0].mxu0
    %v202 = vadd.f32 0.0, %v201
    %v203 = vpop.f32.mrb[0].mxu0
    %v204 = vpop.f32.mrb[0].mxu0
    %v205 = vadd.f32 0.0, %v204
    %v206 = vpop.f32.mrb[0].mxu0
    %207 = vmatprep.mubr.bf16.mxu0 0
    %208 = vmatmul.mubr.bf16.gmra.mrb[0].mxu0 %v117
    %v209 = vpop.f32.mrb[0].mxu0
    %v210 = vadd.f32 0.0, %v209
    %v211 = vpop.f32.mrb[0].mxu0
    %v212 = vpop.f32.mrb[0].mxu0
    %v213 = vadd.f32 0.0, %v212
    %v214 = vpop.f32.mrb[0].mxu0
    %215 = vdwg.mxu0
    %v216 = vpack.c.bf16 %v157, %v154
    %v217 = vpack.c.bf16 %v165, %v162
    %v218 = vpack.c.bf16 %v173, %v170
    %v219 = vpack.c.bf16 %v181, %v178
    %v220 = vpack.c.bf16 %v189, %v186
    %v221 = vpack.c.bf16 %v197, %v194
    %v222 = vpack.c.bf16 %v205, %v202
    %v223 = vpack.c.bf16 %v213, %v210
    %v232 = vunpack.c.l.b16 %v216
    %v233 = vunpack.c.h.b16 %v216
    %v234 = vunpack.c.l.b16 %v217
    %v235 = vunpack.c.h.b16 %v217
    %v236 = vunpack.c.l.b16 %v218
    %v237 = vunpack.c.h.b16 %v218
    %v238 = vunpack.c.l.b16 %v219
    %v239 = vunpack.c.h.b16 %v219
    %v240 = vunpack.c.l.b16 %v220
    %v241 = vunpack.c.h.b16 %v220
    %v242 = vunpack.c.l.b16 %v221
    %v243 = vunpack.c.h.b16 %v221
    %v244 = vunpack.c.l.b16 %v222
    %v245 = vunpack.c.h.b16 %v222
    %v246 = vunpack.c.l.b16 %v223
    %v247 = vunpack.c.h.b16 %v223
    %v248 = vpack.c.b16 %v232, %v232
    %v249 = vpack.c.b16 %v233, %v233
    %v250 = vpack.c.b16 %v234, %v234
    %v251 = vpack.c.b16 %v235, %v235
    %v252 = vpack.c.b16 %v236, %v236
    %v253 = vpack.c.b16 %v237, %v237
    %v254 = vpack.c.b16 %v238, %v238
    %v255 = vpack.c.b16 %v239, %v239
    %v256 = vpack.c.b16 %v240, %v240
    %v257 = vpack.c.b16 %v241, %v241
    %v258 = vpack.c.b16 %v242, %v242
    %v259 = vpack.c.b16 %v243, %v243
    %v260 = vpack.c.b16 %v244, %v244
    %v261 = vpack.c.b16 %v245, %v245
    %v262 = vpack.c.b16 %v246, %v246
    %v263 = vpack.c.b16 %v247, %v247
    %vm280 = vcmask 519168
    %281 = vst.msk [vmem:[%s4] sm:$0xf] %vm280, %v248
    %282 = vst.msk [vmem:[%s4 + $0x4] sm:$0xf] %vm280, %v249
    %283 = vst.msk [vmem:[%s4 + $0x8] sm:$0xf] %vm280, %v250
    %284 = vst.msk [vmem:[%s4 + $0xc] sm:$0xf] %vm280, %v251
    %285 = vst.msk [vmem:[%s4 + $0x10] sm:$0xf] %vm280, %v252
    %286 = vst.msk [vmem:[%s4 + $0x14] sm:$0xf] %vm280, %v253
    %287 = vst.msk [vmem:[%s4 + $0x18] sm:$0xf] %vm280, %v254
    %288 = vst.msk [vmem:[%s4 + $0x1c] sm:$0xf] %vm280, %v255
    %289 = vst.msk [vmem:[%s4 + $0x20] sm:$0xf] %vm280, %v256
    %290 = vst.msk [vmem:[%s4 + $0x24] sm:$0xf] %vm280, %v257
    %291 = vst.msk [vmem:[%s4 + $0x28] sm:$0xf] %vm280, %v258
    %292 = vst.msk [vmem:[%s4 + $0x2c] sm:$0xf] %vm280, %v259
    %293 = vst.msk [vmem:[%s4 + $0x30] sm:$0xf] %vm280, %v260
    %294 = vst.msk [vmem:[%s4 + $0x34] sm:$0xf] %vm280, %v261
    %295 = vst.msk [vmem:[%s4 + $0x38] sm:$0xf] %vm280, %v262
    %296 = vst.msk [vmem:[%s4 + $0x3c] sm:$0xf] %vm280, %v263
    %v297 = vld [vmem:[%s3] sm:$0xff]
    %vm298 = vcmask 523264
    %v300 = vsel %vm298, %v154, 0
    %v303 = vsel %vm298, %v157, 0
    %v306 = vsel %vm298, %v162, 0
    %v309 = vsel %vm298, %v165, 0
    %v312 = vsel %vm298, %v170, 0
    %v315 = vsel %vm298, %v173, 0
    %v318 = vsel %vm298, %v178, 0
    %v321 = vsel %vm298, %v181, 0
    %v324 = vsel %vm298, %v186, 0
    %v327 = vsel %vm298, %v189, 0
    %v330 = vsel %vm298, %v194, 0
    %v333 = vsel %vm298, %v197, 0
    %v336 = vsel %vm298, %v202, 0
    %v339 = vsel %vm298, %v205, 0
    %v342 = vsel %vm298, %v210, 0
    %v345 = vsel %vm298, %v213, 0
    %v348 = vsel %vm298, %v297, 0
    %350 = vmatprep.subr.mxu0 0.0
    %351 = vmatpush1.xpose.msra.mxu0 %v348
    %352 = vmatprep.subr.mxu0 0.0
    %353 = vmatpush1.xpose.msra.mxu0 0.0
    %354 = vmatprep.subr.mxu0 0.0
    %355 = vmatpush1.xpose.msra.mxu0 0.0
    %356 = vmatprep.subr.mxu0 0.0
    %357 = vmatpush1.xpose.msra.mxu0 0.0
    %358 = vmatprep.subr.mxu0 0.0
    %359 = vmatpush1.xpose.msra.mxu0 0.0
    %360 = vmatprep.subr.mxu0 0.0
    %361 = vmatpush1.xpose.msra.mxu0 0.0
    %362 = vmatprep.subr.mxu0 0.0
    %363 = vmatpush1.xpose.msra.mxu0 0.0
    %364 = vmatprep.subr.mxu0 0.0
    %365 = vmatpush1.xpose.msra.mxu0 0.0
    %366 = vmatprep.subr.mxu0 0.0
    %367 = vmatpush1.xpose.msra.mxu0 0.0
    %368 = vmatprep.subr.mxu0 0.0
    %369 = vmatpush1.xpose.msra.mxu0 0.0
    %370 = vmatprep.subr.mxu0 0.0
    %371 = vmatpush1.xpose.msra.mxu0 0.0
    %372 = vmatprep.subr.mxu0 0.0
    %373 = vmatpush1.xpose.msra.mxu0 0.0
    %374 = vmatprep.subr.mxu0 0.0
    %375 = vmatpush1.xpose.msra.mxu0 0.0
    %376 = vmatprep.subr.mxu0 0.0
    %377 = vmatpush1.xpose.msra.mxu0 0.0
    %378 = vmatprep.subr.mxu0 0.0
    %379 = vmatpush1.xpose.msra.mxu0 0.0
    %380 = vmatprep.subr.mxu0 0.0
    %381 = vmatpush1.xpose.msra.mxu0 0.0
    %382 = vmatprep.subr.mxu0 0.0
    %383 = vmatpush1.xpose.msra.mxu0 0.0
    %384 = vmatprep.subr.mxu0 0.0
    %385 = vmatpush1.xpose.msra.mxu0 0.0
    %386 = vmatprep.subr.mxu0 0.0
    %387 = vmatpush1.xpose.msra.mxu0 0.0
    %388 = vmatprep.subr.mxu0 0.0
    %389 = vmatpush1.xpose.msra.mxu0 0.0
    %390 = vmatprep.subr.mxu0 0.0
    %391 = vmatpush1.xpose.msra.mxu0 0.0
    %392 = vmatprep.subr.mxu0 0.0
    %393 = vmatpush1.xpose.msra.mxu0 0.0
    %394 = vmatprep.subr.mxu0 0.0
    %395 = vmatpush1.xpose.msra.mxu0 0.0
    %396 = vmatprep.subr.mxu0 0.0
    %397 = vmatpush1.xpose.msra.mxu0 0.0
    %398 = vmatprep.subr.mxu0 0.0
    %399 = vmatpush1.xpose.msra.mxu0 0.0
    %400 = vmatprep.subr.mxu0 0.0
    %401 = vmatpush1.xpose.msra.mxu0 0.0
    %402 = vmatprep.subr.mxu0 0.0
    %403 = vmatpush1.xpose.msra.mxu0 0.0
    %404 = vmatprep.subr.mxu0 0.0
    %405 = vmatpush1.xpose.msra.mxu0 0.0
    %406 = vmatprep.subr.mxu0 0.0
    %407 = vmatpush1.xpose.msra.mxu0 0.0
    %408 = vmatprep.subr.mxu0 0.0
    %409 = vmatpush1.xpose.msra.mxu0 0.0
    %410 = vmatprep.subr.mxu0 0.0
    %411 = vmatpush1.xpose.msra.mxu0 0.0
    %412 = vmatprep.subr.mxu0 0.0
    %413 = vmatpush1.xpose.msra.mxu0 0.0
    %414 = vmatprep.mubr.f32.mxu0 0.0
    %415 = vmatmul.mubr.f32.gmra.mrb[0].mxu0 %v300
    %v416 = vpop.f32.mrb[0].mxu0
    %v417 = vadd.f32 0.0, %v416
    %v418 = vpop.f32.mrb[0].mxu0
    %419 = vmatprep.mubr.f32.mxu0 0.0
    %420 = vmatmul.mubr.f32.gmra.mrb[0].mxu0 %v303
    %v421 = vpop.f32.mrb[0].mxu0
    %v422 = vadd.f32 0.0, %v421
    %v423 = vpop.f32.mrb[0].mxu0
    %424 = vmatprep.mubr.f32.mxu0 0.0
    %425 = vmatmul.mubr.f32.gmra.mrb[0].mxu0 %v306
    %v426 = vpop.f32.mrb[0].mxu0
    %v427 = vadd.f32 0.0, %v426
    %v428 = vpop.f32.mrb[0].mxu0
    %429 = vmatprep.mubr.f32.mxu0 0.0
    %430 = vmatmul.mubr.f32.gmra.mrb[0].mxu0 %v309
    %v431 = vpop.f32.mrb[0].mxu0
    %v432 = vadd.f32 0.0, %v431
    %v433 = vpop.f32.mrb[0].mxu0
    %434 = vmatprep.mubr.f32.mxu0 0.0
    %435 = vmatmul.mubr.f32.gmra.mrb[0].mxu0 %v312
    %v436 = vpop.f32.mrb[0].mxu0
    %v437 = vadd.f32 0.0, %v436
    %v438 = vpop.f32.mrb[0].mxu0
    %439 = vmatprep.mubr.f32.mxu0 0.0
    %440 = vmatmul.mubr.f32.gmra.mrb[0].mxu0 %v315
    %v441 = vpop.f32.mrb[0].mxu0
    %v442 = vadd.f32 0.0, %v441
    %v443 = vpop.f32.mrb[0].mxu0
    %444 = vmatprep.mubr.f32.mxu0 0.0
    %445 = vmatmul.mubr.f32.gmra.mrb[0].mxu0 %v318
    %v446 = vpop.f32.mrb[0].mxu0
    %v447 = vadd.f32 0.0, %v446
    %v448 = vpop.f32.mrb[0].mxu0
    %449 = vmatprep.mubr.f32.mxu0 0.0
    %450 = vmatmul.mubr.f32.gmra.mrb[0].mxu0 %v321
    %v451 = vpop.f32.mrb[0].mxu0
    %v452 = vadd.f32 0.0, %v451
    %v453 = vpop.f32.mrb[0].mxu0
    %454 = vmatprep.mubr.f32.mxu0 0.0
    %455 = vmatmul.mubr.f32.gmra.mrb[0].mxu0 %v324
    %v456 = vpop.f32.mrb[0].mxu0
    %v457 = vadd.f32 0.0, %v456
    %v458 = vpop.f32.mrb[0].mxu0
    %459 = vmatprep.mubr.f32.mxu0 0.0
    %460 = vmatmul.mubr.f32.gmra.mrb[0].mxu0 %v327
    %v461 = vpop.f32.mrb[0].mxu0
    %v462 = vadd.f32 0.0, %v461
    %v463 = vpop.f32.mrb[0].mxu0
    %464 = vmatprep.mubr.f32.mxu0 0.0
    %465 = vmatmul.mubr.f32.gmra.mrb[0].mxu0 %v330
    %v466 = vpop.f32.mrb[0].mxu0
    %v467 = vadd.f32 0.0, %v466
    %v468 = vpop.f32.mrb[0].mxu0
    %469 = vmatprep.mubr.f32.mxu0 0.0
    %470 = vmatmul.mubr.f32.gmra.mrb[0].mxu0 %v333
    %v471 = vpop.f32.mrb[0].mxu0
    %v472 = vadd.f32 0.0, %v471
    %v473 = vpop.f32.mrb[0].mxu0
    %474 = vmatprep.mubr.f32.mxu0 0.0
    %475 = vmatmul.mubr.f32.gmra.mrb[0].mxu0 %v336
    %v476 = vpop.f32.mrb[0].mxu0
    %v477 = vadd.f32 0.0, %v476
    %v478 = vpop.f32.mrb[0].mxu0
    %479 = vmatprep.mubr.f32.mxu0 0.0
    %480 = vmatmul.mubr.f32.gmra.mrb[0].mxu0 %v339
    %v481 = vpop.f32.mrb[0].mxu0
    %v482 = vadd.f32 0.0, %v481
    %v483 = vpop.f32.mrb[0].mxu0
    %484 = vmatprep.mubr.f32.mxu0 0.0
    %485 = vmatmul.mubr.f32.gmra.mrb[0].mxu0 %v342
    %v486 = vpop.f32.mrb[0].mxu0
    %v487 = vadd.f32 0.0, %v486
    %v488 = vpop.f32.mrb[0].mxu0
    %489 = vmatprep.mubr.f32.mxu0 0.0
    %490 = vmatmul.mubr.f32.gmra.mrb[0].mxu0 %v345
    %v491 = vpop.f32.mrb[0].mxu0
    %v492 = vadd.f32 0.0, %v491
    %v493 = vpop.f32.mrb[0].mxu0
    %494 = vdwg.mxu0
    %vm495 = vcmask 64512
    %496 = vst.msk [vmem:[%s6] sm:$0xff] %vm495, %v417
    %497 = vst.msk [vmem:[%s6 + $0x8] sm:$0xff] %vm495, %v422
    %498 = vst.msk [vmem:[%s6 + $0x10] sm:$0xff] %vm495, %v427
    %499 = vst.msk [vmem:[%s6 + $0x18] sm:$0xff] %vm495, %v432
    %500 = vst.msk [vmem:[%s6 + $0x20] sm:$0xff] %vm495, %v437
    %501 = vst.msk [vmem:[%s6 + $0x28] sm:$0xff] %vm495, %v442
    %502 = vst.msk [vmem:[%s6 + $0x30] sm:$0xff] %vm495, %v447
    %503 = vst.msk [vmem:[%s6 + $0x38] sm:$0xff] %vm495, %v452
    %504 = vst.msk [vmem:[%s6 + $0x40] sm:$0xff] %vm495, %v457
    %505 = vst.msk [vmem:[%s6 + $0x48] sm:$0xff] %vm495, %v462
    %506 = vst.msk [vmem:[%s6 + $0x50] sm:$0xff] %vm495, %v467
    %507 = vst.msk [vmem:[%s6 + $0x58] sm:$0xff] %vm495, %v472
    %508 = vst.msk [vmem:[%s6 + $0x60] sm:$0xff] %vm495, %v477
    %509 = vst.msk [vmem:[%s6 + $0x68] sm:$0xff] %vm495, %v482
    %510 = vst.msk [vmem:[%s6 + $0x70] sm:$0xff] %vm495, %v487
    %511 = vst.msk [vmem:[%s6 + $0x78] sm:$0xff] %vm495, %v492
    %v512 = vld [vmem:[%s2] sm:$0xff]
    %v514 = vsel %vm298, %v512, 0
    %516 = vmatprep.subr.mxu0 0.0
    %517 = vmatpush1.xpose.msra.mxu0 %v300
    %518 = vmatprep.subr.mxu0 0.0
    %519 = vmatpush1.xpose.msra.mxu0 %v303
    %520 = vmatprep.subr.mxu0 0.0
    %521 = vmatpush1.xpose.msra.mxu0 %v306
    %522 = vmatprep.subr.mxu0 0.0
    %523 = vmatpush1.xpose.msra.mxu0 %v309
    %524 = vmatprep.subr.mxu0 0.0
    %525 = vmatpush1.xpose.msra.mxu0 %v312
    %526 = vmatprep.subr.mxu0 0.0
    %527 = vmatpush1.xpose.msra.mxu0 %v315
    %528 = vmatprep.subr.mxu0 0.0
    %529 = vmatpush1.xpose.msra.mxu0 %v318
    %530 = vmatprep.subr.mxu0 0.0
    %531 = vmatpush1.xpose.msra.mxu0 %v321
    %532 = vmatprep.subr.mxu0 0.0
    %533 = vmatpush1.xpose.msra.mxu0 %v324
    %534 = vmatprep.subr.mxu0 0.0
    %535 = vmatpush1.xpose.msra.mxu0 %v327
    %536 = vmatprep.subr.mxu0 0.0
    %537 = vmatpush1.xpose.msra.mxu0 %v330
    %538 = vmatprep.subr.mxu0 0.0
    %539 = vmatpush1.xpose.msra.mxu0 %v333
    %540 = vmatprep.subr.mxu0 0.0
    %541 = vmatpush1.xpose.msra.mxu0 %v336
    %542 = vmatprep.subr.mxu0 0.0
    %543 = vmatpush1.xpose.msra.mxu0 %v339
    %544 = vmatprep.subr.mxu0 0.0
    %545 = vmatpush1.xpose.msra.mxu0 %v342
    %546 = vmatprep.subr.mxu0 0.0
    %547 = vmatpush1.xpose.msra.mxu0 %v345
    %548 = vmatprep.subr.mxu0 0.0
    %549 = vmatpush1.xpose.msra.mxu0 0.0
    %550 = vmatprep.subr.mxu0 0.0
    %551 = vmatpush1.xpose.msra.mxu0 0.0
    %552 = vmatprep.subr.mxu0 0.0
    %553 = vmatpush1.xpose.msra.mxu0 0.0
    %554 = vmatprep.subr.mxu0 0.0
    %555 = vmatpush1.xpose.msra.mxu0 0.0
    %556 = vmatprep.subr.mxu0 0.0
    %557 = vmatpush1.xpose.msra.mxu0 0.0
    %558 = vmatprep.subr.mxu0 0.0
    %559 = vmatpush1.xpose.msra.mxu0 0.0
    %560 = vmatprep.subr.mxu0 0.0
    %561 = vmatpush1.xpose.msra.mxu0 0.0
    %562 = vmatprep.subr.mxu0 0.0
    %563 = vmatpush1.xpose.msra.mxu0 0.0
    %564 = vmatprep.subr.mxu0 0.0
    %565 = vmatpush1.xpose.msra.mxu0 0.0
    %566 = vmatprep.subr.mxu0 0.0
    %567 = vmatpush1.xpose.msra.mxu0 0.0
    %568 = vmatprep.subr.mxu0 0.0
    %569 = vmatpush1.xpose.msra.mxu0 0.0
    %570 = vmatprep.subr.mxu0 0.0
    %571 = vmatpush1.xpose.msra.mxu0 0.0
    %572 = vmatprep.subr.mxu0 0.0
    %573 = vmatpush1.xpose.msra.mxu0 0.0
    %574 = vmatprep.subr.mxu0 0.0
    %575 = vmatpush1.xpose.msra.mxu0 0.0
    %576 = vmatprep.subr.mxu0 0.0
    %577 = vmatpush1.xpose.msra.mxu0 0.0
    %578 = vmatprep.subr.mxu0 0.0
    %579 = vmatpush1.xpose.msra.mxu0 0.0
    %580 = vmatprep.mubr.f32.mxu0 0.0
    %581 = vmatmul.mubr.f32.gmra.mrb[0].mxu0 %v514
    %v582 = vpop.f32.mrb[0].mxu0
    %v583 = vadd.f32 0.0, %v582
    %v584 = vpop.f32.mrb[0].mxu0
    %585 = vdwg.mxu0
    %586 = vst [vmem:[#allocation2] sm:$0xff] %v583
    // Predicated region
    $region18: #{tpu_custom_call.1} parent=1 // pred_check
      _
    $region19: #{tpu_custom_call.1} parent=1 // pred_check_branch
      %588 = sbr.rel (0) target = $region21
    $region20: #{tpu_custom_call.1} parent=1 // pred_region
      _
    $region21: #{tpu_custom_call.1} parent=1 // pred_fallthru
      _
    // Predicated region
    $region22: #{tpu_custom_call.1} parent=1 // pred_check
      _
    $region23: #{tpu_custom_call.1} parent=1 // pred_check_branch
      %590 = sbr.rel (0) target = $region25
    $region24: #{tpu_custom_call.1} parent=1 // pred_region
      %s592 = ssub.s32 128, 128
      %593 = vsyncadd [#allocation3], %s592
      %s595 = sshll.u32 [#allocation2], 4
      %s596 = int_to_ptr.vmem [resolvable:$true] %s595
      %598 = dma.vmem_to_hbm [thread:$0]  %s596, 128, %s5, [#allocation3]
    $region25: #{tpu_custom_call.1} parent=1 // pred_fallthru
      _
    // Predicated region
    $region26: #{tpu_custom_call.1} parent=1 // pred_check
      _
    $region27: #{tpu_custom_call.1} parent=1 // pred_check_branch
      %600 = sbr.rel (0) target = $region29
    $region28: #{tpu_custom_call.1} parent=1 // pred_region
      _
    $region29: #{tpu_custom_call.1} parent=1 // pred_fallthru
      _
    // Predicated region
    $region30: #{tpu_custom_call.1} parent=1 // pred_check
      _
    $region31: #{tpu_custom_call.1} parent=1 // pred_check_branch
      %602 = sbr.rel (0) target = $region33
    $region32: #{tpu_custom_call.1} parent=1 // pred_region
      _
    $region33: #{tpu_custom_call.1} parent=1 // pred_fallthru
      _
    // Predicated region
    $region34: #{tpu_custom_call.1} parent=1 // pred_check
      _
    $region35: #{tpu_custom_call.1} parent=1 // pred_check_branch
      %604 = sbr.rel (0) target = $region37
    $region36: #{tpu_custom_call.1} parent=1 // pred_region
      %605 = dma.done [#allocation3], 128
    $region37: #{tpu_custom_call.1} parent=1 // pred_fallthru
      _
    // Predicated region
    $region38: #{tpu_custom_call.1} parent=1 // pred_check
      _
    $region39: #{tpu_custom_call.1} parent=1 // pred_check_branch
      %607 = sbr.rel (0) target = $region41
    $region40: #{tpu_custom_call.1} parent=1 // pred_region
      _
    $region41: #{tpu_custom_call.1} parent=1 // pred_fallthru
      _
    %608 = vsyncpa [#allocation3], 1

</llo_original>
